<compile_context>
chip_gen: v7x
topology: tpu7x:2x2x1
jax: 0.10.0
libtpu: 0.0.40
codegen_flags: <defaults>
</compile_context>

<pallas_src>
import functools
import math

import jax
import jax.numpy as jnp
from jax.experimental import pallas as pl
from jax.experimental.pallas import tpu as pltpu


_NEG_BIG = -1e9          # additive mask value for padded key positions
_M_INIT = -1e30          # online-softmax running-max init


def _round_up(x, m):
    return ((x + m - 1) // m) * m


def _pick_tile(dim, preferred=(512, 256, 128)):
    """Largest preferred tile dividing `dim`; fall back to the full extent."""
    for t in preferred:
        if dim % t == 0:
            return t
    return dim


def _seq_tile(seq, force=None):
    """Return (padded_seq, tile).  Padded length and tile are multiples of 16."""
    if force is not None:
        assert force % 16 == 0 and force >= 16
        return _round_up(seq, force), force
    if seq <= 512:
        sp = _round_up(seq, 16)
        return sp, sp
    sp = _round_up(seq, 128)
    for t in (512, 256, 128):
        if sp % t == 0:
            return sp, t
    return sp, 128


def _pad_rows(x, target):
    pad = target - x.shape[1]
    if pad == 0:
        return x
    return jnp.pad(x, ((0, 0), (0, pad), (0, 0)))


# --------------------------------------------------------------------------- #
# Fused linear projection kernel: out = x @ w + b  (bf16 MXU, f32 accumulate)  #
# --------------------------------------------------------------------------- #
def _linear_kernel(x_ref, w_ref, b_ref, o_ref, acc_ref):
    @pl.when(pl.program_id(2) == 0)
    def _():
        acc_ref[...] = jnp.zeros_like(acc_ref)

    acc_ref[...] += jnp.dot(x_ref[...], w_ref[...],
                            preferred_element_type=jnp.float32)

    @pl.when(pl.program_id(2) == pl.num_programs(2) - 1)
    def _():
        o_ref[...] = (acc_ref[...] + b_ref[...]).astype(o_ref.dtype)


def _linear_pallas(x, w, b, out_dtype=jnp.bfloat16):
    """x: (N, K) bf16, w: (K, M) bf16 (already transposed), b: (M,) f32."""
    N, K = x.shape
    K2, M = w.shape
    assert K == K2
    tm, tn, tk = _pick_tile(N), _pick_tile(M), _pick_tile(K)
    b2 = jnp.asarray(b, jnp.float32).reshape(1, M)
    return pl.pallas_call(
        _linear_kernel,
        out_shape=jax.ShapeDtypeStruct((N, M), out_dtype),
        grid_spec=pltpu.PrefetchScalarGridSpec(
            num_scalar_prefetch=0,
            grid=(N // tm, M // tn, K // tk),
            in_specs=[
                pl.BlockSpec((tm, tk), lambda i, j, k: (i, k)),
                pl.BlockSpec((tk, tn), lambda i, j, k: (k, j)),
                pl.BlockSpec((1, tn), lambda i, j, k: (0, j)),
            ],
            out_specs=pl.BlockSpec((tm, tn), lambda i, j, k: (i, j)),
            scratch_shapes=[pltpu.VMEM((tm, tn), jnp.float32)],
        ),
        compiler_params=pltpu.CompilerParams(
            dimension_semantics=("parallel", "parallel", "arbitrary")),
    )(x, w, b2)


# --------------------------------------------------------------------------- #
# Multi-head attention kernel (heads packed along columns of each block)       #
# --------------------------------------------------------------------------- #
def _mha_kernel(mask_ref, q_ref, k_ref, v_ref, o_ref, *scratch,
                scale, head_dim, heads, num_kv):
    """One (q-tile, kv-tile) step for `heads` attention heads.

    q_ref:    (tq, heads*D) bf16
    k_ref:    (tk, heads*D) bf16
    v_ref:    (tk, heads*D) bf16
    mask_ref: (1 or tq, tk) f32 additive mask (broadcast over query rows if 1)
    o_ref:    (tq, heads*D) f32
    """
    D = head_dim
    mask = mask_ref[...]

    if num_kv == 1:
        # Single kv block: plain softmax, no running statistics / scratch.
        for h in range(heads):
            sl = slice(h * D, (h + 1) * D)
            q = q_ref[:, sl] * scale
            k = k_ref[:, sl]
            v = v_ref[:, sl]
            s = jax.lax.dot_general(q, k, (((1,), (1,)), ((), ())),
                                    preferred_element_type=jnp.float32)
            s = s + mask
            m = jnp.max(s, axis=-1, keepdims=True)
            p = jnp.exp(s - m)
            l = jnp.sum(p, axis=-1, keepdims=True)
            ctx = jnp.dot(p.astype(v.dtype), v,
                          preferred_element_type=jnp.float32)
            # Dropout on attention probs is identity in eval mode.
            o_ref[:, sl] = (ctx * pl.reciprocal(l, approx=True)).astype(o_ref.dtype)
        return

    m_sc, l_sc, acc_sc = scratch
    ki = pl.program_id(3)

    @pl.when(ki == 0)
    def _():
        m_sc[...] = jnp.full_like(m_sc, _M_INIT)
        l_sc[...] = jnp.zeros_like(l_sc)
        acc_sc[...] = jnp.zeros_like(acc_sc)

    for h in range(heads):
        sl = slice(h * D, (h + 1) * D)
        q = q_ref[:, sl] * scale
        k = k_ref[:, sl]
        v = v_ref[:, sl]
        s = jax.lax.dot_general(q, k, (((1,), (1,)), ((), ())),
                                preferred_element_type=jnp.float32)
        s = s + mask
        m_prev = m_sc[h]
        m_new = jnp.maximum(m_prev, jnp.max(s, axis=-1, keepdims=True))
        alpha = jnp.exp(m_prev - m_new)
        p = jnp.exp(s - m_new)
        l_sc[h] = alpha * l_sc[h] + jnp.sum(p, axis=-1, keepdims=True)
        acc_sc[h] = alpha * acc_sc[h] + jnp.dot(
            p.astype(v.dtype), v, preferred_element_type=jnp.float32)
        m_sc[h] = m_new

    @pl.when(ki == num_kv - 1)
    def _():
        for h in range(heads):
            sl = slice(h * D, (h + 1) * D)
            o_ref[:, sl] = (acc_sc[h] *
                            pl.reciprocal(l_sc[h], approx=True)).astype(o_ref.dtype)


def _mha_pallas(q_buf, k_buf, v_buf, mask, *, B, NH, hpb, D, Sq_p, Skv_p,
                tq, tk, q_col0, k_col0, v_col0, heads_on_rows,
                per_query_mask, scale, out_dtype=jnp.float32):
    """Attention over 2-D (tokens, features) buffers.

    heads_on_rows=False: head groups live in 128-aligned column blocks of the
    (tokens, width) projection buffers (q/k/v may alias the same fused qkv).
    heads_on_rows=True : buffers are (B*NH*seq, D); head index folded in rows.
    """
    cw = hpb * D
    nq = Sq_p // tq
    nk = Skv_p // tk
    num_kv = nk
    nh_blocks = NH // hpb

    # mask lane-block must be a 128 multiple or the full kv extent
    if not (tk % 128 == 0 or tk == Skv_p):
        raise ValueError("kv tile must be a multiple of 128 or the full extent")

    if heads_on_rows:
        assert hpb == 1 and q_col0 == k_col0 == v_col0 == 0
        q_map = lambda b, h, qi, ki: ((b * NH + h) * nq + qi, 0)
        k_map = lambda b, h, qi, ki: ((b * NH + h) * nk + ki, 0)
        v_map = lambda b, h, qi, ki: ((b * NH + h) * nk + ki, 0)
        o_map = lambda b, h, qi, ki: ((b * NH + h) * nq + qi, 0)
        out_rows, out_cols = B * NH * Sq_p, D
    else:
        qc0, kc0, vc0 = q_col0 // cw, k_col0 // cw, v_col0 // cw
        q_map = lambda b, h, qi, ki: (b * nq + qi, qc0 + h)
        k_map = lambda b, h, qi, ki: (b * nk + ki, kc0 + h)
        v_map = lambda b, h, qi, ki: (b * nk + ki, vc0 + h)
        o_map = lambda b, h, qi, ki: (b * nq + qi, h)
        out_rows, out_cols = B * Sq_p, NH * D

    if per_query_mask:
        mask_spec = pl.BlockSpec((None, tq, tk), lambda b, h, qi, ki: (b, qi, ki))
    else:
        mask_spec = pl.BlockSpec((None, 1, tk), lambda b, h, qi, ki: (b, 0, ki))

    scratch = []
    if num_kv > 1:
        scratch = [pltpu.VMEM((hpb, tq, 1), jnp.float32),   # running max
                   pltpu.VMEM((hpb, tq, 1), jnp.float32),   # running denom
                   pltpu.VMEM((hpb, tq, D), jnp.float32)]   # running numerator

    kernel = functools.partial(_mha_kernel, scale=scale, head_dim=D,
                               heads=hpb, num_kv=num_kv)
    return pl.pallas_call(
        kernel,
        out_shape=jax.ShapeDtypeStruct((out_rows, out_cols), out_dtype),
        grid_spec=pltpu.PrefetchScalarGridSpec(
            num_scalar_prefetch=0,
            grid=(B, nh_blocks, nq, nk),
            in_specs=[
                mask_spec,
                pl.BlockSpec((tq, cw), q_map),
                pl.BlockSpec((tk, cw), k_map),
                pl.BlockSpec((tk, cw), v_map),
            ],
            out_specs=pl.BlockSpec((tq, cw), o_map),
            scratch_shapes=scratch,
        ),
        compiler_params=pltpu.CompilerParams(
            dimension_semantics=("parallel", "parallel", "parallel",
                                 "arbitrary")),
    )(mask, q_buf, k_buf, v_buf)


# --------------------------------------------------------------------------- #
# Mask preparation (rank-1 whenever the mask does not vary per query row)      #
# --------------------------------------------------------------------------- #
def _prepare_additive_mask(attention_mask, B, Sq, Skv, Sq_p, Skv_p):
    if attention_mask is None:
        base = jnp.zeros((B, 1, Skv), jnp.float32)
        per_query = False
    else:
        am = jnp.asarray(attention_mask, jnp.float32)
        if am.ndim == 4:
            if am.shape[1] != 1:
                # TODO(synk): per-head additive masks not supported in Pallas path.
                raise NotImplementedError("per-head attention masks not supported")
            am = am[:, 0]                   # (b, q, k)
        elif am.ndim == 2:
            am = am[:, None, :]             # (b, 1, k)
        elif am.ndim == 1:
            am = am[None, None, :]          # (1, 1, k)
        elif am.ndim != 3:
            raise ValueError("unsupported attention_mask rank %d" % am.ndim)
        per_query = am.shape[1] != 1
        qdim = Sq if per_query else 1
        base = jnp.broadcast_to(am, (B, qdim, Skv)).astype(jnp.float32)

    q_pad = (Sq_p - Sq) if per_query else 0
    kv_pad = Skv_p - Skv
    if q_pad or kv_pad:
        base = jnp.pad(base, ((0, 0), (0, q_pad), (0, kv_pad)),
                       constant_values=_NEG_BIG)
    return base, per_query


# --------------------------------------------------------------------------- #
# Parameter preparation (hoisted out of the per-call path)                     #
# --------------------------------------------------------------------------- #
def prepare_attention_params(wq, bq, wk, bk, wv, bv):
    """Precompute fused bf16 projection weights once.  w*: (out, in) PyTorch layout."""
    wq, wk, wv = (jnp.asarray(w, jnp.float32) for w in (wq, wk, wv))
    bq, bk, bv = (jnp.asarray(b, jnp.float32) for b in (bq, bk, bv))
    return {
        "w_qkv": jnp.concatenate([wq.T, wk.T, wv.T], axis=1).astype(jnp.bfloat16),
        "b_qkv": jnp.concatenate([bq, bk, bv], axis=0),
        "w_q": wq.T.astype(jnp.bfloat16),
        "b_q": bq,
        "w_kv": jnp.concatenate([wk.T, wv.T], axis=1).astype(jnp.bfloat16),
        "b_kv": jnp.concatenate([bk, bv], axis=0),
    }


# --------------------------------------------------------------------------- #
# Module-level wrapper (matches BertSelfAttention.forward semantics)           #
# --------------------------------------------------------------------------- #
def bert_self_attention_pallas(hidden_states, params, num_attention_heads,
                               attention_mask=None, encoder_hidden_states=None,
                               output_attentions=False, split_lengths=None,
                               q_tile=None, kv_tile=None):
    if output_attentions:
        # TODO(synk): output_attentions=True needs materialized probs (no flash path).
        raise NotImplementedError("output_attentions=True not supported")
    if split_lengths is not None:
        # TODO(synk): split_lengths incremental-attention path not implemented.
        raise NotImplementedError("split_lengths not supported")

    hidden_states = jnp.asarray(hidden_states)
    B, S, H = hidden_states.shape
    NH = num_attention_heads
    assert H % NH == 0
    D = H // NH
    scale = 1.0 / math.sqrt(D)

    # Smallest head group whose column width is a multiple of 128 lanes.
    hpb = 0
    for h in range(1, NH + 1):
        if NH % h == 0 and (h * D) % 128 == 0:
            hpb = h
            break
    heads_on_rows = hpb == 0
    if heads_on_rows:
        hpb = 1

    Sq_p, tq = _seq_tile(S, q_tile)
    x = _pad_rows(hidden_states, Sq_p).reshape(B * Sq_p, H).astype(jnp.bfloat16)

    if encoder_hidden_states is None:
        Skv = S
        Skv_p = Sq_p
        tk = kv_tile if kv_tile is not None else tq
        assert Skv_p % tk == 0 and tk % 16 == 0
        qkv = _linear_pallas(x, params["w_qkv"], params["b_qkv"])   # (B*Sq_p, 3H)
        q_src = k_src = v_src = qkv
        k_col0, v_col0 = H, 2 * H
    else:
        enc = jnp.asarray(encoder_hidden_states)
        Skv = enc.shape[1]
        Skv_p, tk = _seq_tile(Skv, kv_tile)
        e = _pad_rows(enc, Skv_p).reshape(B * Skv_p, H).astype(jnp.bfloat16)
        q_src = _linear_pallas(x, params["w_q"], params["b_q"])     # (B*Sq_p, H)
        kv = _linear_pallas(e, params["w_kv"], params["b_kv"])      # (B*Skv_p, 2H)
        k_src = v_src = kv
        k_col0, v_col0 = 0, H

    mask, per_query = _prepare_additive_mask(attention_mask, B, S, Skv,
                                             Sq_p, Skv_p)

    if heads_on_rows:
        # Fallback for head dims that cannot form 128-wide column blocks:
        # reorganize to (B*NH*seq, D) via one XLA transpose (extra HBM pass).
        def to_rows(buf2d, col0, seq_p):
            t = buf2d[:, col0:col0 + H].reshape(B, seq_p, NH, D)
            return t.transpose(0, 2, 1, 3).reshape(B * NH * seq_p, D)

        ctx = _mha_pallas(to_rows(q_src, 0, Sq_p),
                          to_rows(k_src, k_col0, Skv_p),
                          to_rows(v_src, v_col0, Skv_p),
                          mask, B=B, NH=NH, hpb=1, D=D,
                          Sq_p=Sq_p, Skv_p=Skv_p, tq=tq, tk=tk,
                          q_col0=0, k_col0=0, v_col0=0, heads_on_rows=True,
                          per_query_mask=per_query, scale=scale)
        ctx = ctx.reshape(B, NH, Sq_p, D).transpose(0, 2, 1, 3).reshape(B, Sq_p, H)
    else:
        ctx = _mha_pallas(q_src, k_src, v_src, mask, B=B, NH=NH, hpb=hpb, D=D,
                          Sq_p=Sq_p, Skv_p=Skv_p, tq=tq, tk=tk,
                          q_col0=0, k_col0=k_col0, v_col0=v_col0,
                          heads_on_rows=False,
                          per_query_mask=per_query, scale=scale)
        ctx = ctx.reshape(B, Sq_p, H)

    return (ctx[:, :S, :],)


# --------------------------------------------------------------------------- #
# Pure-JAX reference (mirrors the PyTorch forward, f32)                        #
# --------------------------------------------------------------------------- #
def bert_self_attention_ref(hidden_states, wq, bq, wk, bk, wv, bv,
                            num_attention_heads, attention_mask=None,
                            encoder_hidden_states=None):
    B, S, H = hidden_states.shape
    NH = num_attention_heads
    D = H // NH
    kv_in = hidden_states if encoder_hidden_states is None else encoder_hidden_states
    Skv = kv_in.shape[1]
    q = hidden_states @ wq.T + bq
    k = kv_in @ wk.T + bk
    v = kv_in @ wv.T + bv

    def split(t, L):
        return t.reshape(B, L, NH, D).transpose(0, 2, 1, 3)

    q, k, v = split(q, S), split(k, Skv), split(v, Skv)
    scores = jnp.einsum("bhqd,bhkd->bhqk", q, k) / math.sqrt(D)
    if attention_mask is not None:
        scores = scores + attention_mask
    probs = jax.nn.softmax(scores, axis=-1)
    ctx = jnp.einsum("bhqk,bhkd->bhqd", probs, v)
    return ctx.transpose(0, 2, 1, 3).reshape(B, S, H)


# --------------------------------------------------------------------------- #
# Tests                                                                         #
# --------------------------------------------------------------------------- #
def _make_weights(key, H):
    ks = jax.random.split(key, 6)
    wq = 0.05 * jax.random.normal(ks[0], (H, H), jnp.float32)
    wk = 0.05 * jax.random.normal(ks[1], (H, H), jnp.float32)
    wv = 0.05 * jax.random.normal(ks[2], (H, H), jnp.float32)
    bq = 0.02 * jax.random.normal(ks[3], (H,), jnp.float32)
    bk = 0.02 * jax.random.normal(ks[4], (H,), jnp.float32)
    bv = 0.02 * jax.random.normal(ks[5], (H,), jnp.float32)
    return wq, bq, wk, bk, wv, bv


def _run_case(name, *, B, S, H, NH, Skv=None, mask_kind="pad",
              q_tile=None, kv_tile=None, seed=0, tol=3e-2):
    key = jax.random.PRNGKey(seed)
    k_h, k_e, k_p = jax.random.split(key, 3)
    hidden = jax.random.normal(k_h, (B, S, H), jnp.float32)
    enc = None
    if Skv is not None:
        enc = jax.random.normal(k_e, (B, Skv, H), jnp.float32)
    wq, bq, wk, bk, wv, bv = _make_weights(k_p, H)

    key_len = Skv if Skv is not None else S
    if mask_kind == "pad":
        lengths = jnp.array([key_len, max(1, (2 * key_len) // 3)], jnp.int32)[:B]
        pad = (jnp.arange(key_len)[None, :] >= lengths[:, None]).astype(jnp.float32)
        mask = (pad * -10000.0)[:, None, None, :]          # (B, 1, 1, Skv)
    elif mask_kind == "causal":
        causal = (jnp.arange(key_len)[None, :] >
                  jnp.arange(S)[:, None]).astype(jnp.float32)
        mask = (causal * -10000.0)[None, None, :, :]        # (1, 1, S, Skv)
    else:
        mask = None

    params = prepare_attention_params(wq, bq, wk, bk, wv, bv)
    out = bert_self_attention_pallas(hidden, params, NH, attention_mask=mask,
                                     encoder_hidden_states=enc,
                                     q_tile=q_tile, kv_tile=kv_tile)[0]
    out = jax.block_until_ready(out)

    ref = bert_self_attention_ref(hidden, wq, bq, wk, bk, wv, bv, NH,
                                  attention_mask=mask,
                                  encoder_hidden_states=enc)
    assert out.shape == ref.shape == (B, S, H)
    err = float(jnp.max(jnp.abs(out - ref)))
    assert err < tol, "%s: max abs err %g > %g" % (name, err, tol)


if __name__ == "__main__":
    # 1. Small canonical shapes (D=8 -> heads-on-rows fallback, single kv block).
    _run_case("small", B=2, S=8, H=32, NH=4, mask_kind="pad", seed=0)
    # 2. Head-dim 64 -> fused 128-wide column-block path (hpb=2), fast path.
    _run_case("fused_fastpath", B=2, S=128, H=256, NH=4, mask_kind="pad", seed=1)
    # 3. Forced tiles -> multi-kv-block online softmax + per-query (causal) mask.
    _run_case("fused_online_softmax", B=2, S=256, H=256, NH=4, mask_kind="causal",
              q_tile=64, kv_tile=128, seed=2)
    # 4. Cross-attention (encoder_hidden_states path).
    _run_case("cross_attention", B=2, S=64, H=256, NH=4, Skv=96,
              mask_kind="pad", seed=3)
    print("KERNEL_OK")
</pallas_src>

<mosaic_0001>
module attributes {stable_mosaic.version = 11 : i64} {
  func.func @_linear_kernel(%arg0: i32, %arg1: i32, %arg2: i32, %arg3: memref<32x32xbf16, #tpu.memory_space<vmem>>, %arg4: memref<32x96xbf16, #tpu.memory_space<vmem>>, %arg5: memref<1x96xf32, #tpu.memory_space<vmem>>, %arg6: memref<32x96xbf16, #tpu.memory_space<vmem>>, %arg7: memref<32x96xf32, #tpu.memory_space<vmem>>) attributes {dimension_semantics = [#tpu.dimension_semantics<parallel>, #tpu.dimension_semantics<parallel>, #tpu.dimension_semantics<arbitrary>], iteration_bounds = array<i64: 1, 1, 1>, scalar_prefetch = 0 : i64, scratch_operands = 1 : i64, tpu.core_type = #tpu.core_type<tc>, window_params = [{transform_indices = @transform_0, window_bounds = array<i64: 32, 32>}, {transform_indices = @transform_1, window_bounds = array<i64: 32, 96>}, {transform_indices = @transform_2, window_bounds = array<i64: 1, 96>}, {transform_indices = @transform_3, window_bounds = array<i64: 32, 96>}]} {
    %c0_i32 = arith.constant 0 : i32
    %0 = arith.cmpi eq, %arg2, %c0_i32 : i32
    %1 = arith.extui %0 : i1 to i32
    %c0_i32_0 = arith.constant 0 : i32
    %2 = arith.cmpi ne, %1, %c0_i32_0 : i32
    scf.if %2 {
      %cst_10 = arith.constant 0.000000e+00 : f32
      %12 = vector.broadcast %cst_10 : f32 to vector<32x96xf32>
      %c0_11 = arith.constant 0 : index
      %c0_12 = arith.constant 0 : index
      %13 = vector.load %arg7[%c0_11, %c0_12] : memref<32x96xf32, #tpu.memory_space<vmem>>, vector<32x96xf32>
      tpu.vector_store %arg7[%c0_11, %c0_12], %12 {strides = array<i32>} : memref<32x96xf32, #tpu.memory_space<vmem>>, vector<32x96xf32>,
    } else {
    }
    %c0 = arith.constant 0 : index
    %c0_1 = arith.constant 0 : index
    %3 = vector.load %arg7[%c0, %c0_1] : memref<32x96xf32, #tpu.memory_space<vmem>>, vector<32x96xf32>
    %c0_2 = arith.constant 0 : index
    %c0_3 = arith.constant 0 : index
    %4 = vector.load %arg3[%c0_2, %c0_3] : memref<32x32xbf16, #tpu.memory_space<vmem>>, vector<32x32xbf16>
    %c0_4 = arith.constant 0 : index
    %c0_5 = arith.constant 0 : index
    %5 = vector.load %arg4[%c0_4, %c0_5] : memref<32x96xbf16, #tpu.memory_space<vmem>>, vector<32x96xbf16>
    %cst = arith.constant dense<0.000000e+00> : vector<32x96xf32>
    %6 = tpu.matmul %4, %5, %cst {dimension_numbers = #tpu.dot_dimension_numbers<[1], [0], [0], [1], [0, 0, 1, 1], [], []>} : vector<32x32xbf16>, vector<32x96xbf16>, vector<32x96xf32> -> vector<32x96xf32>
    %7 = arith.addf %3, %6 : vector<32x96xf32>
    %c0_6 = arith.constant 0 : index
    %c0_7 = arith.constant 0 : index
    %8 = vector.load %arg7[%c0_6, %c0_7] : memref<32x96xf32, #tpu.memory_space<vmem>>, vector<32x96xf32>
    tpu.vector_store %arg7[%c0_6, %c0_7], %7 {strides = array<i32>} : memref<32x96xf32, #tpu.memory_space<vmem>>, vector<32x96xf32>,
    %c0_i32_8 = arith.constant 0 : i32
    %9 = arith.cmpi eq, %arg2, %c0_i32_8 : i32
    %10 = arith.extui %9 : i1 to i32
    %c0_i32_9 = arith.constant 0 : i32
    %11 = arith.cmpi ne, %10, %c0_i32_9 : i32
    scf.if %11 {
      %c0_10 = arith.constant 0 : index
      %c0_11 = arith.constant 0 : index
      %12 = vector.load %arg7[%c0_10, %c0_11] : memref<32x96xf32, #tpu.memory_space<vmem>>, vector<32x96xf32>
      %c0_12 = arith.constant 0 : index
      %c0_13 = arith.constant 0 : index
      %13 = vector.load %arg5[%c0_12, %c0_13] : memref<1x96xf32, #tpu.memory_space<vmem>>, vector<1x96xf32>
      %14 = vector.broadcast %13 : vector<1x96xf32> to vector<32x96xf32>
      %15 = arith.addf %12, %14 : vector<32x96xf32>
      %16 = arith.truncf %15 : vector<32x96xf32> to vector<32x96xbf16>
      %c0_14 = arith.constant 0 : index
      %c0_15 = arith.constant 0 : index
      %17 = vector.load %arg6[%c0_14, %c0_15] : memref<32x96xbf16, #tpu.memory_space<vmem>>, vector<32x96xbf16>
      tpu.vector_store %arg6[%c0_14, %c0_15], %16 {strides = array<i32>} : memref<32x96xbf16, #tpu.memory_space<vmem>>, vector<32x96xbf16>,
    } else {
    }
    return
  }
  func.func @transform_0(%arg0: i32, %arg1: i32, %arg2: i32) -> (i32, i32) {
    %c0_i32 = arith.constant 0 : i32
    return %arg0, %arg2 : i32, i32
  }
  func.func @transform_1(%arg0: i32, %arg1: i32, %arg2: i32) -> (i32, i32) {
    %c0_i32 = arith.constant 0 : i32
    return %arg2, %arg1 : i32, i32
  }
  func.func @transform_2(%arg0: i32, %arg1: i32, %arg2: i32) -> (i32, i32) {
    %c0_i32 = arith.constant 0 : i32
    %c0_i32_0 = arith.constant 0 : i32
    return %c0_i32, %arg1 : i32, i32
  }
  func.func @transform_3(%arg0: i32, %arg1: i32, %arg2: i32) -> (i32, i32) {
    %c0_i32 = arith.constant 0 : i32
    return %arg0, %arg1 : i32, i32
  }
}

</mosaic_0001>

<llo_original>
// kernel: tpu_custom_call.1
$region0: #{tpu_custom_call.1}
  #allocation0 [shape = 'u32[]', space=smem, size = 0x4, offset = 0x4, fixed_abs, tag = 'smem constant byte address 0x4 - core index']
  #allocation1 [shape = 'u32[144,128]{1,0:T(1,128)}', space=vmem, size = 0x12000, scoped, tag = 'internal scratch']
  #allocation2 [shape = 'f32[32,96]{1,0:T(8,128)}', space=vmem, size = 0x4000, scoped, tag = 'scratch operand']
  %s0 = inlined_call_operand.hbm [shape: bf16[32,32], index: 0, kind: input, shape index: {}]
  %s1 = inlined_call_operand.hbm [shape: bf16[32,96], index: 1, kind: input, shape index: {}]
  %s2 = inlined_call_operand.vmem [shape: f32[1,96], index: 2, kind: input, shape index: {}]
  %s3 = inlined_call_operand.hbm [shape: bf16[32,96], index: 3, kind: output, shape index: {}]
  %s4 = sld [smem:[#allocation0]]
  $region38: #{tpu_custom_call.1} parent=0
    _
  %s6 = ssub.s32 1, %s4
  %s7 = scalar_select 0, %s6, %s4
  $region1: #{tpu_custom_call.1} parent=0
    #allocation3 [shape = 'u8[8192]{0}', space=vmem, size = 0x2000, scoped, tag = 'input window, operand 0, single buffered']
    #allocation4 [shape = 's32[1]{0}', space=sflag, size = 0x4, scoped, tag = 'scoped memory for tpu_custom_call.1']
    #allocation5 [shape = 's32[1]{0}', space=sflag, size = 0x4, scoped, tag = 'scoped memory for tpu_custom_call.1']
    #allocation6 [shape = 'u8[8192]{0}', space=vmem, size = 0x2000, scoped, tag = 'input window, operand 1, single buffered']
    #allocation7 [shape = 's32[1]{0}', space=sflag, size = 0x4, scoped, tag = 'scoped memory for tpu_custom_call.1']
    #allocation8 [shape = 'u8[8192]{0}', space=vmem, size = 0x2000, scoped, tag = 'output window, operand 0, single buffered']
    %8 = vsyncpa [#allocation4], 0
    %9 = vsyncpa [#allocation7], 0
    %10 = vsyncpa [#allocation5], 0
    // Predicated region
    $region2: #{tpu_custom_call.1} parent=1 // pred_check
      _
    $region3: #{tpu_custom_call.1} parent=1 // pred_check_branch
      %12 = sbr.rel (0) target = $region5
    $region4: #{tpu_custom_call.1} parent=1 // pred_region
      %s14 = ssub.s32 256, 256
      %15 = vsyncadd [#allocation4], %s14
      %s16 = sshll.u32 [#allocation3], 4
      %s17 = int_to_ptr.vmem [resolvable:$true] %s16
      %22 = dma.hbm_to_vmem [thread:$0]  %s0, 256, %s17, [#allocation4], 64, 64, 4
    $region5: #{tpu_custom_call.1} parent=1 // pred_fallthru
      _
    // Predicated region
    $region6: #{tpu_custom_call.1} parent=1 // pred_check
      _
    $region7: #{tpu_custom_call.1} parent=1 // pred_check_branch
      %24 = sbr.rel (0) target = $region9
    $region8: #{tpu_custom_call.1} parent=1 // pred_region
      %s26 = ssub.s32 256, 256
      %27 = vsyncadd [#allocation7], %s26
      %s28 = sshll.u32 [#allocation6], 4
      %s29 = int_to_ptr.vmem [resolvable:$true] %s28
      %34 = dma.hbm_to_vmem [thread:$0]  %s1, 256, %s29, [#allocation7], 64, 64, 4
    $region9: #{tpu_custom_call.1} parent=1 // pred_fallthru
      _
    // Predicated region
    $region10: #{tpu_custom_call.1} parent=1 // pred_check
      _
    $region11: #{tpu_custom_call.1} parent=1 // pred_check_branch
      %36 = sbr.rel (0) target = $region13
    $region12: #{tpu_custom_call.1} parent=1 // pred_region
      _
    $region13: #{tpu_custom_call.1} parent=1 // pred_fallthru
      _
    // Predicated region
    $region14: #{tpu_custom_call.1} parent=1 // pred_check
      _
    $region15: #{tpu_custom_call.1} parent=1 // pred_check_branch
      %38 = sbr.rel (0) target = $region17
    $region16: #{tpu_custom_call.1} parent=1 // pred_region
      %39 = dma.done [#allocation4], 256
    $region17: #{tpu_custom_call.1} parent=1 // pred_fallthru
      _
    // Predicated region
    $region18: #{tpu_custom_call.1} parent=1 // pred_check
      _
    $region19: #{tpu_custom_call.1} parent=1 // pred_check_branch
      %41 = sbr.rel (0) target = $region21
    $region20: #{tpu_custom_call.1} parent=1 // pred_region
      %42 = dma.done [#allocation7], 256
    $region21: #{tpu_custom_call.1} parent=1 // pred_fallthru
      _
    %p44 = scmp.eq.s32.totalorder 0, 0
    // Predicated region
    $region22: #{tpu_custom_call.1} parent=1 // pred_check
      %p45 = pneg %p44
    $region23: #{tpu_custom_call.1} parent=1 // pred_check_branch
      %47 = sbr.rel (%p45) target = $region25
    $region24: #{tpu_custom_call.1} parent=1 // pred_region
      %vm48 = vcmask 785408
      %49 = vst.msk [vmem:[#allocation2] sm:$0xff] %vm48, 0.0
      %50 = vst.msk [vmem:[#allocation2 + $0x8] sm:$0xff] %vm48, 0.0
      %51 = vst.msk [vmem:[#allocation2 + $0x10] sm:$0xff] %vm48, 0.0
      %52 = vst.msk [vmem:[#allocation2 + $0x18] sm:$0xff] %vm48, 0.0
    $region25: #{tpu_custom_call.1} parent=1 // pred_fallthru
      _
    %v53 = vld [vmem:[#allocation2] sm:$0xff]
    %v54 = vld [vmem:[#allocation2 + $0x8] sm:$0xff]
    %v55 = vld [vmem:[#allocation2 + $0x10] sm:$0xff]
    %v56 = vld [vmem:[#allocation2 + $0x18] sm:$0xff]
    %v57 = vld [vmem:[#allocation3] sm:$0xf]
    %v58 = vld [vmem:[#allocation3 + $0x4] sm:$0xf]
    %v59 = vld [vmem:[#allocation3 + $0x8] sm:$0xf]
    %v60 = vld [vmem:[#allocation3 + $0xc] sm:$0xf]
    %v61 = vld [vmem:[#allocation6] sm:$0xf]
    %v62 = vld [vmem:[#allocation6 + $0x4] sm:$0xf]
    %v63 = vld [vmem:[#allocation6 + $0x8] sm:$0xf]
    %v64 = vld [vmem:[#allocation6 + $0xc] sm:$0xf]
    %v69 = vunpack.c.l.b16 %v57
    %v70 = vunpack.c.l.b16 %v58
    %v71 = vunpack.c.l.b16 %v59
    %v72 = vunpack.c.l.b16 %v60
    %v73 = vpack.c.b16 %v70, %v69
    %v74 = vpack.c.b16 %v72, %v71
    %v79 = vunpack.c.l.b16 %v61
    %v80 = vunpack.c.l.b16 %v62
    %v81 = vunpack.c.l.b16 %v63
    %v82 = vunpack.c.l.b16 %v64
    %v83 = vpack.c.b16 %v80, %v79
    %v84 = vpack.c.b16 %v82, %v81
    %vm87 = vcmask 261120
    %v89 = vsel %vm87, %v73, 0
    %v92 = vsel %vm87, %v74, 0
    %94 = vmatprep.subr.bf16.mxu0 0
    %95 = vmatpush1.bf16.msra.mxu0 %v83
    %96 = vmatprep.subr.bf16.mxu0 0
    %97 = vmatpush1.bf16.msra.mxu0 %v84
    %98 = vmatprep.subr.bf16.mxu0 0
    %99 = vmatpush1.bf16.msra.mxu0 0
    %100 = vmatprep.subr.bf16.mxu0 0
    %101 = vmatpush1.bf16.msra.mxu0 0
    %102 = vmatprep.subr.bf16.mxu0 0
    %103 = vmatpush1.bf16.msra.mxu0 0
    %104 = vmatprep.subr.bf16.mxu0 0
    %105 = vmatpush1.bf16.msra.mxu0 0
    %106 = vmatprep.subr.bf16.mxu0 0
    %107 = vmatpush1.bf16.msra.mxu0 0
    %108 = vmatprep.subr.bf16.mxu0 0
    %109 = vmatpush1.bf16.msra.mxu0 0
    %110 = vmatprep.subr.bf16.mxu0 0
    %111 = vmatpush1.bf16.msra.mxu0 0
    %112 = vmatprep.subr.bf16.mxu0 0
    %113 = vmatpush1.bf16.msra.mxu0 0
    %114 = vmatprep.subr.bf16.mxu0 0
    %115 = vmatpush1.bf16.msra.mxu0 0
    %116 = vmatprep.subr.bf16.mxu0 0
    %117 = vmatpush1.bf16.msra.mxu0 0
    %118 = vmatprep.subr.bf16.mxu0 0
    %119 = vmatpush1.bf16.msra.mxu0 0
    %120 = vmatprep.subr.bf16.mxu0 0
    %121 = vmatpush1.bf16.msra.mxu0 0
    %122 = vmatprep.subr.bf16.mxu0 0
    %123 = vmatpush1.bf16.msra.mxu0 0
    %124 = vmatprep.subr.bf16.mxu0 0
    %125 = vmatpush1.bf16.msra.mxu0 0
    %126 = vmatprep.mubr.bf16.mxu0 0
    %127 = vmatmul.mubr.bf16.gmra.mrb[0].mxu0 %v89
    %v128 = vpop.f32.mrb[0].mxu0
    %v129 = vadd.f32 0.0, %v128
    %v130 = vpop.f32.mrb[0].mxu0
    %v131 = vpop.f32.mrb[0].mxu0
    %v132 = vadd.f32 0.0, %v131
    %v133 = vpop.f32.mrb[0].mxu0
    %134 = vmatprep.mubr.bf16.mxu0 0
    %135 = vmatmul.mubr.bf16.gmra.mrb[0].mxu0 %v92
    %v136 = vpop.f32.mrb[0].mxu0
    %v137 = vadd.f32 0.0, %v136
    %v138 = vpop.f32.mrb[0].mxu0
    %v139 = vpop.f32.mrb[0].mxu0
    %v140 = vadd.f32 0.0, %v139
    %v141 = vpop.f32.mrb[0].mxu0
    %142 = vdwg.mxu0
    %v143 = vadd.f32 %v53, %v129
    %v144 = vadd.f32 %v54, %v132
    %v145 = vadd.f32 %v55, %v137
    %v146 = vadd.f32 %v56, %v140
    %vm147 = vcmask 785408
    %148 = vst.msk [vmem:[#allocation2] sm:$0xff] %vm147, %v143
    %149 = vst.msk [vmem:[#allocation2 + $0x8] sm:$0xff] %vm147, %v144
    %150 = vst.msk [vmem:[#allocation2 + $0x10] sm:$0xff] %vm147, %v145
    %151 = vst.msk [vmem:[#allocation2 + $0x18] sm:$0xff] %vm147, %v146
    // Predicated region
    $region26: #{tpu_custom_call.1} parent=1 // pred_check
      %p152 = pneg %p44
    $region27: #{tpu_custom_call.1} parent=1 // pred_check_branch
      %154 = sbr.rel (%p152) target = $region29
    $region28: #{tpu_custom_call.1} parent=1 // pred_region
      %v155 = vld [vmem:[#allocation2] sm:$0xff]
      %v156 = vld [vmem:[#allocation2 + $0x8] sm:$0xff]
      %v157 = vld [vmem:[#allocation2 + $0x10] sm:$0xff]
      %v158 = vld [vmem:[#allocation2 + $0x18] sm:$0xff]
      %v159 = vld [vmem:[%s2] sm:$0x1]
      %v161 = vlaneseq
      %v162 = vshrl.u32 %v161, 7
      %v163 = vsub.s32 0, %v162
      %v164 = vrot.slane %v159, %v163
      %v166 = vadd.f32 %v155, %v164
      %v167 = vadd.f32 %v156, %v164
      %v168 = vadd.f32 %v157, %v164
      %v169 = vadd.f32 %v158, %v164
      %v170 = vpack.c.bf16 %v167, %v166
      %v171 = vpack.c.bf16 %v169, %v168
      %v174 = vunpack.c.l.b16 %v170
      %v175 = vunpack.c.h.b16 %v170
      %v176 = vunpack.c.l.b16 %v171
      %v177 = vunpack.c.h.b16 %v171
      %v178 = vpack.c.b16 %v174, %v174
      %v179 = vpack.c.b16 %v175, %v175
      %v180 = vpack.c.b16 %v176, %v176
      %v181 = vpack.c.b16 %v177, %v177
      %vm186 = vcmask 781312
      %187 = vst.msk [vmem:[#allocation8] sm:$0xf] %vm186, %v178
      %188 = vst.msk [vmem:[#allocation8 + $0x4] sm:$0xf] %vm186, %v179
      %189 = vst.msk [vmem:[#allocation8 + $0x8] sm:$0xf] %vm186, %v180
      %190 = vst.msk [vmem:[#allocation8 + $0xc] sm:$0xf] %vm186, %v181
    $region29: #{tpu_custom_call.1} parent=1 // pred_fallthru
      _
    // Predicated region
    $region30: #{tpu_custom_call.1} parent=1 // pred_check
      _
    $region31: #{tpu_custom_call.1} parent=1 // pred_check_branch
      %192 = sbr.rel (0) target = $region33
    $region32: #{tpu_custom_call.1} parent=1 // pred_region
      %s194 = ssub.s32 256, 256
      %195 = vsyncadd [#allocation5], %s194
      %s196 = sshll.u32 [#allocation8], 4
      %s197 = int_to_ptr.vmem [resolvable:$true] %s196
      %202 = dma.vmem_to_hbm [thread:$0]  %s197, 256, %s3, [#allocation5], 64, 64, 4
    $region33: #{tpu_custom_call.1} parent=1 // pred_fallthru
      _
    // Predicated region
    $region34: #{tpu_custom_call.1} parent=1 // pred_check
      _
    $region35: #{tpu_custom_call.1} parent=1 // pred_check_branch
      %204 = sbr.rel (0) target = $region37
    $region36: #{tpu_custom_call.1} parent=1 // pred_region
      %205 = dma.done [#allocation5], 256
    $region37: #{tpu_custom_call.1} parent=1 // pred_fallthru
      _
    %206 = vsyncpa [#allocation4], 1
    %207 = vsyncpa [#allocation7], 1
    %208 = vsyncpa [#allocation5], 1

</llo_original>
